<compile_context>
chip_gen: v6e
topology: v6e:2x2x1
jax: 0.10.0
libtpu: 0.0.40
codegen_flags: <defaults>
</compile_context>

<pallas_src>
import jax
import jax.numpy as jnp
from jax.experimental import pallas as pl
from jax.experimental.pallas import tpu as pltpu

LN_EPS = 1e-5


def prediction_kernel(x_ref, w1_ref, b1_ref, g_ref, beta_ref,
                      w2_ref, b2_ref, w3_ref, b3_ref, o_ref):
    # ---- Linear 1 (bf16 MXU, f32 accumulate) ----
    h1 = jnp.dot(x_ref[...], w1_ref[...],
                 preferred_element_type=jnp.float32) + b1_ref[...]

    # ---- LayerNorm over last dim (f32 on VPU/XLU/EUP) ----
    mean = jnp.mean(h1, axis=-1, keepdims=True)
    centered = h1 - mean
    var = jnp.mean(centered * centered, axis=-1, keepdims=True)
    h1 = centered * jax.lax.rsqrt(var + LN_EPS)
    h1 = h1 * g_ref[...] + beta_ref[...]

    # ---- Dropout(p=0.25) is identity at inference; ReLU ----
    h1 = jnp.maximum(h1, 0.0)

    # ---- Linear 2 + ReLU (Dropout identity) ----
    h2 = jnp.dot(h1.astype(w2_ref.dtype), w2_ref[...],
                 preferred_element_type=jnp.float32) + b2_ref[...]
    h2 = jnp.maximum(h2, 0.0)

    # ---- Linear 3 at true output width (O is tiny; masked vst is trivial) ----
    y = jnp.dot(h2.astype(w3_ref.dtype), w3_ref[...],
                preferred_element_type=jnp.float32) + b3_ref[...]
    o_ref[...] = y.astype(o_ref.dtype)


def prediction_forward(x2d, params, *, tm=None):
    """x2d: (M, input_dim) flattened tokens. Returns (M, out_dim)."""
    w1, b1, g, beta, w2, b2, w3, b3 = params
    M, D = x2d.shape
    H1 = w1.shape[1]
    H2 = w2.shape[1]
    O = w3.shape[1]
    out_dtype = x2d.dtype

    # bf16 operands for the MXU (accumulation stays f32 inside the kernel).
    xb = x2d.astype(jnp.bfloat16)
    w1b = w1.astype(jnp.bfloat16)
    w2b = w2.astype(jnp.bfloat16)
    w3b = w3.astype(jnp.bfloat16)

    # Row tiling:
    #   * M <= 1024: single step (tm = M), zero grid overhead.
    #   * larger M : big tiles (<= 2048 rows) but always >= 2 grid steps so
    #     the "parallel" row axis shards across v7x's two TensorCores.
    # No jnp.pad of x: Pallas partial trailing blocks are safe here because
    # every op is per-row and out-of-range output rows are never written back.
    if tm is None:
        if M <= 1024:
            tm = M
        else:
            tm = min(2048, ((pl.cdiv(M, 2) + 7) // 8) * 8)

    grid = (pl.cdiv(M, tm),)
    const = lambda i: (0, 0)  # parameters: block index never changes -> resident

    flops = 2 * M * (D * H1 + H1 * H2 + H2 * O)
    bytes_accessed = (
        xb.size * 2
        + (w1b.size + w2b.size + w3b.size) * 2
        + (b1.size + g.size + beta.size + b2.size + b3.size) * 4
        + M * O * jnp.dtype(out_dtype).itemsize
    )
    cost = pl.CostEstimate(flops=flops, transcendentals=M,
                           bytes_accessed=bytes_accessed)

    y = pl.pallas_call(
        prediction_kernel,
        out_shape=jax.ShapeDtypeStruct((M, O), out_dtype),
        grid_spec=pl.GridSpec(
            grid=grid,
            in_specs=[
                pl.BlockSpec((tm, D), lambda i: (i, 0)),   # x rows
                pl.BlockSpec((D, H1), const),              # W1 (bf16)
                pl.BlockSpec((1, H1), const),              # b1
                pl.BlockSpec((1, H1), const),              # LN gamma
                pl.BlockSpec((1, H1), const),              # LN beta
                pl.BlockSpec((H1, H2), const),             # W2 (bf16)
                pl.BlockSpec((1, H2), const),              # b2
                pl.BlockSpec((H2, O), const),              # W3 (bf16, true width)
                pl.BlockSpec((1, O), const),               # b3
            ],
            out_specs=pl.BlockSpec((tm, O), lambda i: (i, 0)),
        ),
        compiler_params=pltpu.CompilerParams(
            dimension_semantics=("parallel",)),
        cost_estimate=cost,
    )(xb, w1b, b1, g, beta, w2b, b2, w3b, b3)

    return y


def init_params(key, input_dim, n_hidden_1, n_hidden_2, out_dim, dtype=jnp.float32):
    """Deterministic synthetic init (shapes match nn.Linear / nn.LayerNorm)."""
    ks = jax.random.split(key, 6)

    def lin(kw, kb, fan_in, fan_out):
        bound = 1.0 / jnp.sqrt(fan_in)
        w = jax.random.uniform(kw, (fan_in, fan_out), dtype, -bound, bound)
        b = jax.random.uniform(kb, (1, fan_out), dtype, -bound, bound)
        return w, b

    w1, b1 = lin(ks[0], ks[1], input_dim, n_hidden_1)
    w2, b2 = lin(ks[2], ks[3], n_hidden_1, n_hidden_2)
    w3, b3 = lin(ks[4], ks[5], n_hidden_2, out_dim)
    gamma = jnp.ones((1, n_hidden_1), dtype)   # nn.LayerNorm default
    beta = jnp.zeros((1, n_hidden_1), dtype)
    return (w1, b1, gamma, beta, w2, b2, w3, b3)


def reference_forward(x2d, params):
    """Pure-JAX f32 reference for correctness check."""
    w1, b1, g, beta, w2, b2, w3, b3 = params
    h1 = x2d @ w1 + b1
    mean = jnp.mean(h1, axis=-1, keepdims=True)
    var = jnp.mean((h1 - mean) ** 2, axis=-1, keepdims=True)
    h1 = (h1 - mean) * jax.lax.rsqrt(var + LN_EPS) * g + beta
    h1 = jnp.maximum(h1, 0.0)
    h2 = jnp.maximum(h1 @ w2 + b2, 0.0)
    return h2 @ w3 + b3


if __name__ == "__main__":
    # Small shapes consistent with the module: Prediction(32, 64, 48, 1)
    batch, seq = 2, 8
    input_dim, n_hidden_1, n_hidden_2, out_dim = 32, 64, 48, 1

    key = jax.random.PRNGKey(0)
    kx, kp = jax.random.split(key)
    x = jax.random.normal(kx, (batch, seq, input_dim), jnp.float32)
    params = init_params(kp, input_dim, n_hidden_1, n_hidden_2, out_dim)

    x2d = x.reshape(batch * seq, input_dim)      # (16, 32): tm=M=16, grid=(1,)
    y2d = prediction_forward(x2d, params)
    y = y2d.reshape(batch, seq, out_dim)
    jax.block_until_ready(y)

    # correctness vs pure-JAX f32 reference (tolerance loosened for bf16 matmuls)
    y_ref = reference_forward(x2d, params).reshape(batch, seq, out_dim)
    assert jnp.allclose(y, y_ref, atol=2e-2, rtol=2e-2), "mismatch vs reference"

    print("KERNEL_OK")
</pallas_src>

<mosaic_0001>
module attributes {stable_mosaic.version = 11 : i64} {
  func.func @prediction_kernel(%arg0: i32, %arg1: memref<16x32xbf16, #tpu.memory_space<vmem>>, %arg2: memref<32x64xbf16, #tpu.memory_space<vmem>>, %arg3: memref<1x64xf32, #tpu.memory_space<vmem>>, %arg4: memref<1x64xf32, #tpu.memory_space<vmem>>, %arg5: memref<1x64xf32, #tpu.memory_space<vmem>>, %arg6: memref<64x48xbf16, #tpu.memory_space<vmem>>, %arg7: memref<1x48xf32, #tpu.memory_space<vmem>>, %arg8: memref<48x1xbf16, #tpu.memory_space<vmem>>, %arg9: memref<1x1xf32, #tpu.memory_space<vmem>>, %arg10: memref<16x1xf32, #tpu.memory_space<vmem>>) attributes {dimension_semantics = [#tpu.dimension_semantics<parallel>], iteration_bounds = array<i64: 1>, scalar_prefetch = 0 : i64, scratch_operands = 0 : i64, tpu.core_type = #tpu.core_type<tc>, window_params = [{transform_indices = @transform_0, window_bounds = array<i64: 16, 32>}, {pipeline_mode = #tpu.pipeline_mode<synchronous>, transform_indices = @transform_1, window_bounds = array<i64: 32, 64>}, {pipeline_mode = #tpu.pipeline_mode<synchronous>, transform_indices = @transform_2, window_bounds = array<i64: 1, 64>}, {pipeline_mode = #tpu.pipeline_mode<synchronous>, transform_indices = @transform_3, window_bounds = array<i64: 1, 64>}, {pipeline_mode = #tpu.pipeline_mode<synchronous>, transform_indices = @transform_4, window_bounds = array<i64: 1, 64>}, {pipeline_mode = #tpu.pipeline_mode<synchronous>, transform_indices = @transform_5, window_bounds = array<i64: 64, 48>}, {pipeline_mode = #tpu.pipeline_mode<synchronous>, transform_indices = @transform_6, window_bounds = array<i64: 1, 48>}, {pipeline_mode = #tpu.pipeline_mode<synchronous>, transform_indices = @transform_7, window_bounds = array<i64: 48, 1>}, {pipeline_mode = #tpu.pipeline_mode<synchronous>, transform_indices = @transform_8, window_bounds = array<i64: 1, 1>}, {transform_indices = @transform_9, window_bounds = array<i64: 16, 1>}]} {
    %c0 = arith.constant 0 : index
    %c0_0 = arith.constant 0 : index
    %0 = vector.load %arg1[%c0, %c0_0] : memref<16x32xbf16, #tpu.memory_space<vmem>>, vector<16x32xbf16>
    %c0_1 = arith.constant 0 : index
    %c0_2 = arith.constant 0 : index
    %1 = vector.load %arg2[%c0_1, %c0_2] : memref<32x64xbf16, #tpu.memory_space<vmem>>, vector<32x64xbf16>
    %cst = arith.constant dense<0.000000e+00> : vector<16x64xf32>
    %2 = tpu.matmul %0, %1, %cst {dimension_numbers = #tpu.dot_dimension_numbers<[1], [0], [0], [1], [0, 0, 1, 1], [], []>} : vector<16x32xbf16>, vector<32x64xbf16>, vector<16x64xf32> -> vector<16x64xf32>
    %c0_3 = arith.constant 0 : index
    %c0_4 = arith.constant 0 : index
    %3 = vector.load %arg3[%c0_3, %c0_4] : memref<1x64xf32, #tpu.memory_space<vmem>>, vector<1x64xf32>
    %4 = vector.broadcast %3 : vector<1x64xf32> to vector<16x64xf32>
    %5 = arith.addf %2, %4 : vector<16x64xf32>
    %cst_5 = arith.constant dense<0.000000e+00> : vector<16xf32>
    %6 = vector.multi_reduction <add>, %5, %cst_5 [1] : vector<16x64xf32> to vector<16xf32>
    %7 = vector.shape_cast %6 : vector<16xf32> to vector<16x1xf32>
    %cst_6 = arith.constant 6.400000e+01 : f32
    %8 = vector.broadcast %cst_6 : f32 to vector<16x1xf32>
    %9 = arith.divf %7, %8 : vector<16x1xf32>
    %10 = vector.broadcast %9 : vector<16x1xf32> to vector<16x64xf32>
    %11 = arith.subf %5, %10 : vector<16x64xf32>
    %12 = arith.mulf %11, %11 : vector<16x64xf32>
    %cst_7 = arith.constant dense<0.000000e+00> : vector<16xf32>
    %13 = vector.multi_reduction <add>, %12, %cst_7 [1] : vector<16x64xf32> to vector<16xf32>
    %14 = vector.shape_cast %13 : vector<16xf32> to vector<16x1xf32>
    %cst_8 = arith.constant 6.400000e+01 : f32
    %15 = vector.broadcast %cst_8 : f32 to vector<16x1xf32>
    %16 = arith.divf %14, %15 : vector<16x1xf32>
    %cst_9 = arith.constant 9.99999974E-6 : f32
    %17 = vector.broadcast %cst_9 : f32 to vector<16x1xf32>
    %18 = arith.addf %16, %17 : vector<16x1xf32>
    %19 = math.rsqrt %18 : vector<16x1xf32>
    %20 = vector.broadcast %19 : vector<16x1xf32> to vector<16x64xf32>
    %21 = arith.mulf %11, %20 : vector<16x64xf32>
    %c0_10 = arith.constant 0 : index
    %c0_11 = arith.constant 0 : index
    %22 = vector.load %arg4[%c0_10, %c0_11] : memref<1x64xf32, #tpu.memory_space<vmem>>, vector<1x64xf32>
    %23 = vector.broadcast %22 : vector<1x64xf32> to vector<16x64xf32>
    %24 = arith.mulf %21, %23 : vector<16x64xf32>
    %c0_12 = arith.constant 0 : index
    %c0_13 = arith.constant 0 : index
    %25 = vector.load %arg5[%c0_12, %c0_13] : memref<1x64xf32, #tpu.memory_space<vmem>>, vector<1x64xf32>
    %26 = vector.broadcast %25 : vector<1x64xf32> to vector<16x64xf32>
    %27 = arith.addf %24, %26 : vector<16x64xf32>
    %cst_14 = arith.constant 0.000000e+00 : f32
    %28 = vector.broadcast %cst_14 : f32 to vector<16x64xf32>
    %29 = arith.maximumf %27, %28 : vector<16x64xf32>
    %30 = arith.truncf %29 : vector<16x64xf32> to vector<16x64xbf16>
    %c0_15 = arith.constant 0 : index
    %c0_16 = arith.constant 0 : index
    %31 = vector.load %arg6[%c0_15, %c0_16] : memref<64x48xbf16, #tpu.memory_space<vmem>>, vector<64x48xbf16>
    %cst_17 = arith.constant dense<0.000000e+00> : vector<16x48xf32>
    %32 = tpu.matmul %30, %31, %cst_17 {dimension_numbers = #tpu.dot_dimension_numbers<[1], [0], [0], [1], [0, 0, 1, 1], [], []>} : vector<16x64xbf16>, vector<64x48xbf16>, vector<16x48xf32> -> vector<16x48xf32>
    %c0_18 = arith.constant 0 : index
    %c0_19 = arith.constant 0 : index
    %33 = vector.load %arg7[%c0_18, %c0_19] : memref<1x48xf32, #tpu.memory_space<vmem>>, vector<1x48xf32>
    %34 = vector.broadcast %33 : vector<1x48xf32> to vector<16x48xf32>
    %35 = arith.addf %32, %34 : vector<16x48xf32>
    %cst_20 = arith.constant 0.000000e+00 : f32
    %36 = vector.broadcast %cst_20 : f32 to vector<16x48xf32>
    %37 = arith.maximumf %35, %36 : vector<16x48xf32>
    %38 = arith.truncf %37 : vector<16x48xf32> to vector<16x48xbf16>
    %c0_21 = arith.constant 0 : index
    %c0_22 = arith.constant 0 : index
    %39 = vector.load %arg8[%c0_21, %c0_22] : memref<48x1xbf16, #tpu.memory_space<vmem>>, vector<48x1xbf16>
    %cst_23 = arith.constant dense<0.000000e+00> : vector<16x1xf32>
    %40 = tpu.matmul %38, %39, %cst_23 {dimension_numbers = #tpu.dot_dimension_numbers<[1], [0], [0], [1], [0, 0, 1, 1], [], []>} : vector<16x48xbf16>, vector<48x1xbf16>, vector<16x1xf32> -> vector<16x1xf32>
    %c0_24 = arith.constant 0 : index
    %c0_25 = arith.constant 0 : index
    %41 = vector.load %arg9[%c0_24, %c0_25] : memref<1x1xf32, #tpu.memory_space<vmem>>, vector<1x1xf32>
    %42 = vector.broadcast %41 : vector<1x1xf32> to vector<16x1xf32>
    %43 = arith.addf %40, %42 : vector<16x1xf32>
    %c0_26 = arith.constant 0 : index
    %c0_27 = arith.constant 0 : index
    %44 = vector.load %arg10[%c0_26, %c0_27] : memref<16x1xf32, #tpu.memory_space<vmem>>, vector<16x1xf32>
    tpu.vector_store %arg10[%c0_26, %c0_27], %43 {strides = array<i32>} : memref<16x1xf32, #tpu.memory_space<vmem>>, vector<16x1xf32>,
    return
  }
  func.func @transform_0(%arg0: i32) -> (i32, i32) {
    %c0_i32 = arith.constant 0 : i32
    %c0_i32_0 = arith.constant 0 : i32
    return %arg0, %c0_i32 : i32, i32
  }
  func.func @transform_1(%arg0: i32) -> (i32, i32) {
    %c0_i32 = arith.constant 0 : i32
    %c0_i32_0 = arith.constant 0 : i32
    %c0_i32_1 = arith.constant 0 : i32
    return %c0_i32, %c0_i32_0 : i32, i32
  }
  func.func @transform_2(%arg0: i32) -> (i32, i32) {
    %c0_i32 = arith.constant 0 : i32
    %c0_i32_0 = arith.constant 0 : i32
    %c0_i32_1 = arith.constant 0 : i32
    return %c0_i32, %c0_i32_0 : i32, i32
  }
  func.func @transform_3(%arg0: i32) -> (i32, i32) {
    %c0_i32 = arith.constant 0 : i32
    %c0_i32_0 = arith.constant 0 : i32
    %c0_i32_1 = arith.constant 0 : i32
    return %c0_i32, %c0_i32_0 : i32, i32
  }
  func.func @transform_4(%arg0: i32) -> (i32, i32) {
    %c0_i32 = arith.constant 0 : i32
    %c0_i32_0 = arith.constant 0 : i32
    %c0_i32_1 = arith.constant 0 : i32
    return %c0_i32, %c0_i32_0 : i32, i32
  }
  func.func @transform_5(%arg0: i32) -> (i32, i32) {
    %c0_i32 = arith.constant 0 : i32
    %c0_i32_0 = arith.constant 0 : i32
    %c0_i32_1 = arith.constant 0 : i32
    return %c0_i32, %c0_i32_0 : i32, i32
  }
  func.func @transform_6(%arg0: i32) -> (i32, i32) {
    %c0_i32 = arith.constant 0 : i32
    %c0_i32_0 = arith.constant 0 : i32
    %c0_i32_1 = arith.constant 0 : i32
    return %c0_i32, %c0_i32_0 : i32, i32
  }
  func.func @transform_7(%arg0: i32) -> (i32, i32) {
    %c0_i32 = arith.constant 0 : i32
    %c0_i32_0 = arith.constant 0 : i32
    %c0_i32_1 = arith.constant 0 : i32
    return %c0_i32, %c0_i32_0 : i32, i32
  }
  func.func @transform_8(%arg0: i32) -> (i32, i32) {
    %c0_i32 = arith.constant 0 : i32
    %c0_i32_0 = arith.constant 0 : i32
    %c0_i32_1 = arith.constant 0 : i32
    return %c0_i32, %c0_i32_0 : i32, i32
  }
  func.func @transform_9(%arg0: i32) -> (i32, i32) {
    %c0_i32 = arith.constant 0 : i32
    %c0_i32_0 = arith.constant 0 : i32
    return %arg0, %c0_i32 : i32, i32
  }
}

</mosaic_0001>

<llo_original>
// kernel: tpu_custom_call.1
$region0: #{tpu_custom_call.1}
  #allocation0 [shape = 'u32[]', space=smem, size = 0x4, offset = 0x4, fixed_abs, tag = 'smem constant byte address 0x4 - core index']
  #allocation1 [shape = 'u32[144,128]{1,0:T(1,128)}', space=vmem, size = 0x12000, scoped, tag = 'internal scratch']
  #allocation2 [shape = 'f32[1,1]{1,0:T(1,128)S(1)}', space=vmem, size = 0x200, scoped, tag = 'scoped memory for tpu_custom_call.1']
  %s0 = inlined_call_operand.vmem [shape: bf16[16,32], index: 0, kind: input, shape index: {}]
  %s1 = inlined_call_operand.vmem [shape: bf16[32,64], index: 1, kind: input, shape index: {}]
  %s2 = inlined_call_operand.vmem [shape: f32[1,64], index: 2, kind: input, shape index: {}]
  %s3 = inlined_call_operand.vmem [shape: f32[1,64], index: 3, kind: input, shape index: {}]
  %s4 = inlined_call_operand.vmem [shape: f32[1,64], index: 4, kind: input, shape index: {}]
  %s5 = inlined_call_operand.vmem [shape: bf16[64,48], index: 5, kind: input, shape index: {}]
  %s6 = inlined_call_operand.vmem [shape: f32[1,48], index: 6, kind: input, shape index: {}]
  %s7 = inlined_call_operand.vmem [shape: bf16[48,1], index: 7, kind: input, shape index: {}]
  %s8 = inlined_call_operand.<no memory space> [shape: f32[1,1], index: 8, kind: input, shape index: {}]
  %s9 = inlined_call_operand.vmem [shape: f32[16,1], index: 9, kind: output, shape index: {}]
  %s10 = sld [smem:[#allocation0]]
  $region46: #{tpu_custom_call.1} parent=0
    _
  %s12 = ssub.s32 1, %s10
  %s13 = scalar_select 0, %s12, %s10
  %v14 = vstv %s8
  %15 = vst [vmem:[#allocation2] sm:$0x1] %v14
  // Predicated region
  $region2: #{tpu_custom_call.1} parent=0 // pred_check
    _
  $region3: #{tpu_custom_call.1} parent=0 // pred_check_branch
    %17 = sbr.rel (0) target = $region5
  $region4: #{tpu_custom_call.1} parent=0 // pred_region
    _
  $region5: #{tpu_custom_call.1} parent=0 // pred_fallthru
    _
  // Predicated region
  $region6: #{tpu_custom_call.1} parent=0 // pred_check
    _
  $region7: #{tpu_custom_call.1} parent=0 // pred_check_branch
    %19 = sbr.rel (0) target = $region9
  $region8: #{tpu_custom_call.1} parent=0 // pred_region
    _
  $region9: #{tpu_custom_call.1} parent=0 // pred_fallthru
    _
  // Predicated region
  $region10: #{tpu_custom_call.1} parent=0 // pred_check
    _
  $region11: #{tpu_custom_call.1} parent=0 // pred_check_branch
    %21 = sbr.rel (0) target = $region13
  $region12: #{tpu_custom_call.1} parent=0 // pred_region
    _
  $region13: #{tpu_custom_call.1} parent=0 // pred_fallthru
    _
  // Predicated region
  $region14: #{tpu_custom_call.1} parent=0 // pred_check
    _
  $region15: #{tpu_custom_call.1} parent=0 // pred_check_branch
    %23 = sbr.rel (0) target = $region17
  $region16: #{tpu_custom_call.1} parent=0 // pred_region
    _
  $region17: #{tpu_custom_call.1} parent=0 // pred_fallthru
    _
  // Predicated region
  $region18: #{tpu_custom_call.1} parent=0 // pred_check
    _
  $region19: #{tpu_custom_call.1} parent=0 // pred_check_branch
    %25 = sbr.rel (0) target = $region21
  $region20: #{tpu_custom_call.1} parent=0 // pred_region
    _
  $region21: #{tpu_custom_call.1} parent=0 // pred_fallthru
    _
  // Predicated region
  $region22: #{tpu_custom_call.1} parent=0 // pred_check
    _
  $region23: #{tpu_custom_call.1} parent=0 // pred_check_branch
    %27 = sbr.rel (0) target = $region25
  $region24: #{tpu_custom_call.1} parent=0 // pred_region
    _
  $region25: #{tpu_custom_call.1} parent=0 // pred_fallthru
    _
  // Predicated region
  $region26: #{tpu_custom_call.1} parent=0 // pred_check
    _
  $region27: #{tpu_custom_call.1} parent=0 // pred_check_branch
    %29 = sbr.rel (0) target = $region29
  $region28: #{tpu_custom_call.1} parent=0 // pred_region
    _
  $region29: #{tpu_custom_call.1} parent=0 // pred_fallthru
    _
  // Predicated region
  $region30: #{tpu_custom_call.1} parent=0 // pred_check
    _
  $region31: #{tpu_custom_call.1} parent=0 // pred_check_branch
    %31 = sbr.rel (0) target = $region33
  $region32: #{tpu_custom_call.1} parent=0 // pred_region
    _
  $region33: #{tpu_custom_call.1} parent=0 // pred_fallthru
    _
  // Predicated region
  $region34: #{tpu_custom_call.1} parent=0 // pred_check
    _
  $region35: #{tpu_custom_call.1} parent=0 // pred_check_branch
    %33 = sbr.rel (0) target = $region37
  $region36: #{tpu_custom_call.1} parent=0 // pred_region
    _
  $region37: #{tpu_custom_call.1} parent=0 // pred_fallthru
    _
  %v35 = vld [vmem:[%s0] sm:$0xf]
  %v36 = vld [vmem:[%s0 + $0x4] sm:$0xf]
  %v37 = vld [vmem:[%s1] sm:$0xf]
  %v38 = vld [vmem:[%s1 + $0x4] sm:$0xf]
  %v39 = vld [vmem:[%s1 + $0x8] sm:$0xf]
  %v40 = vld [vmem:[%s1 + $0xc] sm:$0xf]
  %v41 = vld [vmem:[%s2] sm:$0x1]
  %v43 = vlaneseq
  %v44 = vshrl.u32 %v43, 7
  %v45 = vsub.s32 0, %v44
  %v46 = vrot.slane %v41, %v45
  %v50 = vunpack.c.l.b16 %v35
  %v51 = vunpack.c.l.b16 %v36
  %v52 = vpack.c.b16 %v51, %v50
  %v57 = vunpack.c.l.b16 %v37
  %v58 = vunpack.c.l.b16 %v38
  %v59 = vunpack.c.l.b16 %v39
  %v60 = vunpack.c.l.b16 %v40
  %v61 = vpack.c.b16 %v58, %v57
  %v62 = vpack.c.b16 %v60, %v59
  %vm65 = vcmask 261120
  %v67 = vsel %vm65, %v52, 0
  %69 = vmatprep.subr.bf16.mxu0 0
  %70 = vmatpush1.bf16.msra.mxu0 0
  %71 = vmatprep.subr.bf16.mxu0 0
  %72 = vmatpush1.bf16.msra.mxu0 0
  %73 = vmatprep.subr.bf16.mxu0 0
  %74 = vmatpush1.bf16.msra.mxu0 0
  %75 = vmatprep.subr.bf16.mxu0 0
  %76 = vmatpush1.bf16.msra.mxu0 0
  %77 = vmatprep.subr.bf16.mxu0 0
  %78 = vmatpush1.bf16.msra.mxu0 0
  %79 = vmatprep.subr.bf16.mxu0 0
  %80 = vmatpush1.bf16.msra.mxu0 0
  %81 = vmatprep.subr.bf16.mxu0 0
  %82 = vmatpush1.bf16.msra.mxu0 %v62
  %83 = vmatprep.subr.bf16.mxu0 0
  %84 = vmatpush1.bf16.msra.mxu0 %v61
  %85 = vmatprep.subr.bf16.mxu0 0
  %86 = vmatpush2.bf16.msra.mxu0 0
  %87 = vmatprep.subr.bf16.mxu0 0
  %88 = vmatpush2.bf16.msra.mxu0 0
  %89 = vmatprep.subr.bf16.mxu0 0
  %90 = vmatpush2.bf16.msra.mxu0 0
  %91 = vmatprep.subr.bf16.mxu0 0
  %92 = vmatpush2.bf16.msra.mxu0 0
  %93 = vmatprep.subr.bf16.mxu0 0
  %94 = vmatpush2.bf16.msra.mxu0 0
  %95 = vmatprep.subr.bf16.mxu0 0
  %96 = vmatpush2.bf16.msra.mxu0 0
  %97 = vmatprep.subr.bf16.mxu0 0
  %98 = vmatpush2.bf16.msra.mxu0 0
  %99 = vmatprep.subr.bf16.mxu0 0
  %100 = vmatpush2.bf16.msra.mxu0 0
  %101 = vmatprep.mubr.bf16.mxu0 0
  %102 = vmatmul.mubr.bf16.gmra.mxu0 %v67
  %v103 = vpop.f32.mrf.mxu0
  %v104 = vadd.f32 %v46, %v103
  %v105 = vpop.f32.mrf.mxu0
  %v106 = vpop.f32.mrf.mxu0
  %v107 = vadd.f32 %v46, %v106
  %v108 = vpop.f32.mrf.mxu0
  %109 = vdwg.mxu0
  %vm110 = vcmask 523264
  %v111 = vsel %vm110, %v104, 0.0
  %112 = vadd.xlane.f32.xlu0 %v111
  %v113 = vpop.xlane.xlu0 %112
  %v114 = vsel %vm110, %v107, 0.0
  %115 = vadd.xlane.f32.xlu0 %v114
  %v116 = vpop.xlane.xlu0 %115
  %v117 = vrcp.pop 64.0
  %v118 = vmul.f32 %v113, %v117
  %v119 = vmul.f32 %v116, %v117
  %v120 = vsub.f32 %v104, %v118
  %v121 = vsub.f32 %v107, %v119
  %v122 = vmul.f32 %v120, %v120
  %v123 = vmul.f32 %v121, %v121
  %v124 = vsel %vm110, %v122, 0.0
  %125 = vadd.xlane.f32.xlu0 %v124
  %v126 = vpop.xlane.xlu0 %125
  %v127 = vsel %vm110, %v123, 0.0
  %128 = vadd.xlane.f32.xlu0 %v127
  %v129 = vpop.xlane.xlu0 %128
  %v130 = vmul.f32 %v126, %v117
  %v131 = vmul.f32 %v129, %v117
  %v132 = vadd.f32 %v130, 1e-05
  %v133 = vadd.f32 %v131, 1e-05
  %v134 = vrsqrt.pop %v132
  %v135 = vrsqrt.pop %v133
  %v136 = vmul.f32 %v120, %v134
  %v137 = vmul.f32 %v121, %v135
  %v138 = vld [vmem:[%s3] sm:$0x1]
  %v140 = vlaneseq
  %v141 = vshrl.u32 %v140, 7
  %v142 = vsub.s32 0, %v141
  %v143 = vrot.slane %v138, %v142
  %v145 = vmul.f32 %v136, %v143
  %v146 = vmul.f32 %v137, %v143
  %v147 = vld [vmem:[%s4] sm:$0x1]
  %v149 = vlaneseq
  %v150 = vshrl.u32 %v149, 7
  %v151 = vsub.s32 0, %v150
  %v152 = vrot.slane %v147, %v151
  %v154 = vadd.f32 %v145, %v152
  %v155 = vadd.f32 %v146, %v152
  %v156 = vmax.f32 %v154, 0.0
  %v157 = vmax.f32 %v155, 0.0
  %v158 = vpack.c.bf16 %v157, %v156
  %v159 = vld [vmem:[%s5] sm:$0xf]
  %v160 = vld [vmem:[%s5 + $0x4] sm:$0xf]
  %v161 = vld [vmem:[%s5 + $0x8] sm:$0xf]
  %v162 = vld [vmem:[%s5 + $0xc] sm:$0xf]
  %v163 = vld [vmem:[%s5 + $0x10] sm:$0xf]
  %v164 = vld [vmem:[%s5 + $0x14] sm:$0xf]
  %v165 = vld [vmem:[%s5 + $0x18] sm:$0xf]
  %v166 = vld [vmem:[%s5 + $0x1c] sm:$0xf]
  %v167 = vld [vmem:[%s6] sm:$0x1]
  %v169 = vlaneseq
  %v170 = vshrl.u32 %v169, 7
  %v171 = vsub.s32 0, %v170
  %v172 = vrot.slane %v167, %v171
  %v182 = vunpack.c.l.b16 %v159
  %v183 = vunpack.c.l.b16 %v160
  %v184 = vunpack.c.l.b16 %v161
  %v185 = vunpack.c.l.b16 %v162
  %v186 = vunpack.c.l.b16 %v163
  %v187 = vunpack.c.l.b16 %v164
  %v188 = vunpack.c.l.b16 %v165
  %v189 = vunpack.c.l.b16 %v166
  %v190 = vpack.c.b16 %v183, %v182
  %v191 = vpack.c.b16 %v185, %v184
  %v192 = vpack.c.b16 %v187, %v186
  %v193 = vpack.c.b16 %v189, %v188
  %v199 = vsel %vm110, %v158, 0
  %201 = vmatprep.subr.bf16.mxu0 0
  %202 = vmatpush1.bf16.msra.mxu0 0
  %203 = vmatprep.subr.bf16.mxu0 0
  %204 = vmatpush1.bf16.msra.mxu0 0
  %205 = vmatprep.subr.bf16.mxu0 0
  %206 = vmatpush1.bf16.msra.mxu0 0
  %207 = vmatprep.subr.bf16.mxu0 0
  %208 = vmatpush1.bf16.msra.mxu0 0
  %209 = vmatprep.subr.bf16.mxu0 0
  %210 = vmatpush1.bf16.msra.mxu0 %v193
  %211 = vmatprep.subr.bf16.mxu0 0
  %212 = vmatpush1.bf16.msra.mxu0 %v192
  %213 = vmatprep.subr.bf16.mxu0 0
  %214 = vmatpush1.bf16.msra.mxu0 %v191
  %215 = vmatprep.subr.bf16.mxu0 0
  %216 = vmatpush1.bf16.msra.mxu0 %v190
  %217 = vmatprep.subr.bf16.mxu0 0
  %218 = vmatpush2.bf16.msra.mxu0 0
  %219 = vmatprep.subr.bf16.mxu0 0
  %220 = vmatpush2.bf16.msra.mxu0 0
  %221 = vmatprep.subr.bf16.mxu0 0
  %222 = vmatpush2.bf16.msra.mxu0 0
  %223 = vmatprep.subr.bf16.mxu0 0
  %224 = vmatpush2.bf16.msra.mxu0 0
  %225 = vmatprep.subr.bf16.mxu0 0
  %226 = vmatpush2.bf16.msra.mxu0 0
  %227 = vmatprep.subr.bf16.mxu0 0
  %228 = vmatpush2.bf16.msra.mxu0 0
  %229 = vmatprep.subr.bf16.mxu0 0
  %230 = vmatpush2.bf16.msra.mxu0 0
  %231 = vmatprep.subr.bf16.mxu0 0
  %232 = vmatpush2.bf16.msra.mxu0 0
  %233 = vmatprep.mubr.bf16.mxu0 0
  %234 = vmatmul.mubr.bf16.gmra.mxu0 %v199
  %v235 = vpop.f32.mrf.mxu0
  %v236 = vadd.f32 %v172, %v235
  %v237 = vpop.f32.mrf.mxu0
  %v238 = vpop.f32.mrf.mxu0
  %v239 = vadd.f32 %v172, %v238
  %v240 = vpop.f32.mrf.mxu0
  %241 = vdwg.mxu0
  %v242 = vmax.f32 %v236, 0.0
  %v243 = vmax.f32 %v239, 0.0
  %v244 = vpack.c.bf16 %v243, %v242
  %v245 = vld [vmem:[%s7] sm:$0xf]
  %v246 = vld [vmem:[%s7 + $0x4] sm:$0xf]
  %v247 = vld [vmem:[%s7 + $0x8] sm:$0xf]
  %v248 = vld [vmem:[%s7 + $0xc] sm:$0xf]
  %v249 = vld [vmem:[%s7 + $0x10] sm:$0xf]
  %v250 = vld [vmem:[%s7 + $0x14] sm:$0xf]
  %v251 = vld [vmem:[#allocation2] sm:$0x1]
  %v253 = vlaneseq
  %v254 = vshrl.u32 %v253, 7
  %v255 = vsub.s32 0, %v254
  %v256 = vrot.slane %v251, %v255
  %v264 = vunpack.c.l.b16 %v245
  %v265 = vunpack.c.l.b16 %v246
  %v266 = vunpack.c.l.b16 %v247
  %v267 = vunpack.c.l.b16 %v248
  %v268 = vunpack.c.l.b16 %v249
  %v269 = vunpack.c.l.b16 %v250
  %v270 = vpack.c.b16 %v265, %v264
  %v271 = vpack.c.b16 %v267, %v266
  %v272 = vpack.c.b16 %v269, %v268
  %vm276 = vcmask 392192
  %v278 = vsel %vm276, %v244, 0
  %280 = vmatprep.subr.bf16.mxu0 0
  %281 = vmatpush1.bf16.msra.mxu0 0
  %282 = vmatprep.subr.bf16.mxu0 0
  %283 = vmatpush1.bf16.msra.mxu0 0
  %284 = vmatprep.subr.bf16.mxu0 0
  %285 = vmatpush1.bf16.msra.mxu0 0
  %286 = vmatprep.subr.bf16.mxu0 0
  %287 = vmatpush1.bf16.msra.mxu0 0
  %288 = vmatprep.subr.bf16.mxu0 0
  %289 = vmatpush1.bf16.msra.mxu0 0
  %290 = vmatprep.subr.bf16.mxu0 0
  %291 = vmatpush1.bf16.msra.mxu0 %v272
  %292 = vmatprep.subr.bf16.mxu0 0
  %293 = vmatpush1.bf16.msra.mxu0 %v271
  %294 = vmatprep.subr.bf16.mxu0 0
  %295 = vmatpush1.bf16.msra.mxu0 %v270
  %296 = vmatprep.subr.bf16.mxu0 0
  %297 = vmatpush2.bf16.msra.mxu0 0
  %298 = vmatprep.subr.bf16.mxu0 0
  %299 = vmatpush2.bf16.msra.mxu0 0
  %300 = vmatprep.subr.bf16.mxu0 0
  %301 = vmatpush2.bf16.msra.mxu0 0
  %302 = vmatprep.subr.bf16.mxu0 0
  %303 = vmatpush2.bf16.msra.mxu0 0
  %304 = vmatprep.subr.bf16.mxu0 0
  %305 = vmatpush2.bf16.msra.mxu0 0
  %306 = vmatprep.subr.bf16.mxu0 0
  %307 = vmatpush2.bf16.msra.mxu0 0
  %308 = vmatprep.subr.bf16.mxu0 0
  %309 = vmatpush2.bf16.msra.mxu0 0
  %310 = vmatprep.subr.bf16.mxu0 0
  %311 = vmatpush2.bf16.msra.mxu0 0
  %312 = vmatprep.mubr.bf16.mxu0 0
  %313 = vmatmul.mubr.bf16.gmra.mxu0 %v278
  %v314 = vpop.f32.mrf.mxu0
  %v315 = vadd.f32 %v256, %v314
  %v316 = vpop.f32.mrf.mxu0
  %v317 = vpop.f32.mrf.mxu0
  %v318 = vadd.f32 %v256, %v317
  %v319 = vpop.f32.mrf.mxu0
  %320 = vdwg.mxu0
  %vm321 = vcmask 7168
  %322 = vst.msk [vmem:[%s9] sm:$0xff] %vm321, %v315
  %323 = vst.msk [vmem:[%s9 + $0x8] sm:$0xff] %vm321, %v318
  // Predicated region
  $region38: #{tpu_custom_call.1} parent=0 // pred_check
    _
  $region39: #{tpu_custom_call.1} parent=0 // pred_check_branch
    %325 = sbr.rel (0) target = $region41
  $region40: #{tpu_custom_call.1} parent=0 // pred_region
    _
  $region41: #{tpu_custom_call.1} parent=0 // pred_fallthru
    _
  // Predicated region
  $region42: #{tpu_custom_call.1} parent=0 // pred_check
    _
  $region43: #{tpu_custom_call.1} parent=0 // pred_check_branch
    %327 = sbr.rel (0) target = $region45
  $region44: #{tpu_custom_call.1} parent=0 // pred_region
    _
  $region45: #{tpu_custom_call.1} parent=0 // pred_fallthru
    _

</llo_original>
